<compile_context>
chip_gen: v6e
topology: v6e:2x2x1
jax: 0.10.0
libtpu: 0.0.40
codegen_flags: <defaults>
</compile_context>

<pallas_src>
import functools

import jax
import jax.numpy as jnp
from jax.experimental import pallas as pl
from jax.experimental.pallas import tpu as pltpu

NUM_HEADS = 8
HIDDEN = 256
TXT_DIM = 768
IMG_DIM = 1280
FUSED_DIM = TXT_DIM + IMG_DIM       # 2048 = attention input_size in the module
NUM_CLASSES = 3
PCOLS = NUM_HEADS * NUM_CLASSES     # 24 folded classifier columns (class-major)
OUT_COLS = PCOLS + NUM_HEADS        # 32 = folded classifier + folded scores
MAX_TILE = 512


def _cdiv(a, b):
    return -(-a // b)


def _round_up(n, m):
    return ((n + m - 1) // m) * m


def _choose_tile(b):
    """Batch tile: multiple of 8, <=512, and >=2 grid steps whenever possible."""
    n_tiles = max(2, _cdiv(b, MAX_TILE))
    tb = _round_up(_cdiv(b, n_tiles), 8)
    return min(max(tb, 8), MAX_TILE)


def _fusion_kernel(xt_ref, xi_ref, w_ref, b_ref, bc_ref, out_ref):
    """Fusion head for one batch tile.

    xt_ref : [TB, 768]   text features.
    xi_ref : [TB, 1280]  image features.
    w_ref  : [1280, 32]  cols 0:24  = wv_trim @ wc (class-major: col = n*8+h),
                         cols 24:32 = wq_trim @ wh (folded score weights).
    b_ref  : [1, 32]     matching folded biases.
    bc_ref : [1, 3]      classifier bias.
    out_ref: [TB, 3]
    """
    w = w_ref[...]                                                   # [1280, 32]
    b = b_ref[...]                                                   # [1, 32]

    # One small matmul per sequence position (text rows only touch the first
    # 768 rows of the folded weight; the F.pad zero columns never exist here).
    sv_t = jnp.dot(xt_ref[...], w[:TXT_DIM, :],
                   preferred_element_type=jnp.float32) + b           # [TB, 32]
    sv_i = jnp.dot(xi_ref[...], w,
                   preferred_element_type=jnp.float32) + b           # [TB, 32]

    p_t, s_t = sv_t[:, :PCOLS], sv_t[:, PCOLS:]                      # [TB,24],[TB,8]
    p_i, s_i = sv_i[:, :PCOLS], sv_i[:, PCOLS:]

    # Softmax over the 2 sequence positions (text vs. img), per head.
    m = jnp.maximum(s_t, s_i)
    e_t = jnp.exp(s_t - m)
    e_i = jnp.exp(s_i - m)
    inv = pl.reciprocal(e_t + e_i, approx=True)                      # EUP, free slot
    a_t = e_t * inv                                                  # [TB, 8]
    a_i = e_i * inv

    # Class-major combine: out[:, n] = bc[n] + sum_h a_t*p_t[:, n*8+h] + a_i*p_i[:, n*8+h]
    cols = []
    for n in range(NUM_CLASSES):
        lo = n * NUM_HEADS
        hi = lo + NUM_HEADS
        cols.append(jnp.sum(a_t * p_t[:, lo:hi] + a_i * p_i[:, lo:hi],
                            axis=-1, keepdims=True))                 # [TB, 1]
    out_ref[...] = jnp.concatenate(cols, axis=1) + bc_ref[...]


def fold_params(params):
    """One-time algebraic folding of the fusion-head weights (HIGHEST precision).

    scores = (x @ wq + bq) @ wh + bh          -> x @ (wq@wh) + (bq@wh + bh)
    out_hn = (x @ wv + bv) @ wc[head h, :, n] -> x @ (wv@wc_cm) + bv@wc_cm
    Weight rows 1280:2048 are dropped (both F.pad inputs are zero there).
    Classifier is laid out class-major: col = n*8 + h.
    """
    hp = jax.lax.Precision.HIGHEST
    wc = params["wc_t"].reshape(NUM_HEADS, HIDDEN, NUM_CLASSES)      # [8,256,3]
    wc_cm = jnp.transpose(wc, (1, 2, 0)).reshape(HIDDEN, PCOLS)      # [256,24]

    wv = params["wv_t"][:IMG_DIM]                                    # [1280,256]
    w_p = jnp.dot(wv, wc_cm, precision=hp)                           # [1280,24]
    b_p = jnp.dot(params["bv"], wc_cm, precision=hp)                 # [1,24]

    w_s = jnp.dot(params["wq_t"][:IMG_DIM], params["wh_t"], precision=hp)      # [1280,8]
    b_s = jnp.dot(params["bq"], params["wh_t"], precision=hp) + params["bh"]   # [1,8]

    return {
        "w": jnp.concatenate([w_p, w_s], axis=1),                    # [1280,32]
        "b": jnp.concatenate([b_p, b_s], axis=1),                    # [1,32]
        "bc": params["bc"],                                          # [1,3]
    }


def multimodel_attention_forward(text_features, img_features, folded):
    """JAX wrapper: batch-tiled pallas_call over the pre-folded fusion head.

    text_features: [B, 768]        float32
    img_features : [B, 1280, 1, 1] float32
    """
    b = text_features.shape[0]
    img_feat = img_features.reshape(b, img_features.shape[1])        # [B, 1280]

    tb = _choose_tile(b)
    bp = _round_up(b, tb)
    g = bp // tb
    if bp != b:
        text_features = jnp.pad(text_features, ((0, bp - b), (0, 0)))
        img_feat = jnp.pad(img_feat, ((0, bp - b), (0, 0)))

    out = pl.pallas_call(
        _fusion_kernel,
        out_shape=jax.ShapeDtypeStruct((bp, NUM_CLASSES), jnp.float32),
        grid=(g,),
        in_specs=[
            pl.BlockSpec((tb, TXT_DIM), lambda i: (i, 0)),           # text tile
            pl.BlockSpec((tb, IMG_DIM), lambda i: (i, 0)),           # img tile
            pl.BlockSpec((IMG_DIM, OUT_COLS), lambda i: (0, 0)),     # resident weight
            pl.BlockSpec((1, OUT_COLS), lambda i: (0, 0)),           # folded bias
            pl.BlockSpec((1, NUM_CLASSES), lambda i: (0, 0)),        # classifier bias
        ],
        out_specs=pl.BlockSpec((tb, NUM_CLASSES), lambda i: (i, 0)),
        compiler_params=pltpu.CompilerParams(
            dimension_semantics=("parallel",)),
    )(text_features, img_feat, folded["w"], folded["b"], folded["bc"])
    return out[:b], None


def _reference_forward(text_features, img_features, params):
    """Pure-JAX reference replicating the PyTorch semantics exactly."""
    b = text_features.shape[0]
    img_feat = img_features.reshape(b, img_features.shape[1])
    x_text = jnp.pad(text_features, ((0, 0), (0, IMG_DIM)))
    x_img = jnp.pad(img_feat, ((0, 0), (0, TXT_DIM)))
    x = jnp.stack([x_text, x_img], axis=1)                           # [B, 2, 2048]

    hp = jax.lax.Precision.HIGHEST
    q = jnp.dot(x, params["wq_t"], precision=hp) + params["bq"]      # [B, 2, 256]
    v = jnp.dot(x, params["wv_t"], precision=hp) + params["bv"]      # [B, 2, 256]
    scores = jnp.dot(q, params["wh_t"], precision=hp) + params["bh"] # [B, 2, 8]
    attn = jax.nn.softmax(scores, axis=1)                            # softmax over seq
    fused = jnp.einsum("bsh,bsc->bhc", attn, v,
                       precision=hp).reshape(b, NUM_HEADS * HIDDEN)  # [B, 2048]
    out = jnp.dot(fused, params["wc_t"], precision=hp) + params["bc"]
    return out


def _init_linear(key, fan_in, fan_out):
    """Deterministic nn.Linear-style init: U(-1/sqrt(fan_in), 1/sqrt(fan_in))."""
    kw, kb = jax.random.split(key)
    bound = 1.0 / jnp.sqrt(fan_in)
    w = jax.random.uniform(kw, (fan_out, fan_in), jnp.float32, -bound, bound)
    b_ = jax.random.uniform(kb, (fan_out,), jnp.float32, -bound, bound)
    return w, b_


def make_params(key):
    keys = jax.random.split(key, 4 + NUM_HEADS)
    wq, bq = _init_linear(keys[0], FUSED_DIM, HIDDEN)
    wv, bv = _init_linear(keys[1], FUSED_DIM, HIDDEN)
    wc, bc = _init_linear(keys[2], FUSED_DIM, NUM_CLASSES)
    # 8 attention heads, each Linear(256 -> 1); stack into [256, 8] transposed.
    head_ws, head_bs = [], []
    for h in range(NUM_HEADS):
        whh, bhh = _init_linear(keys[4 + h], HIDDEN, 1)
        head_ws.append(whh)       # [1, 256]
        head_bs.append(bhh)       # [1]
    wh = jnp.concatenate(head_ws, axis=0)      # [8, 256]
    bh = jnp.concatenate(head_bs, axis=0)      # [8]
    return {
        "wq_t": wq.T, "bq": bq.reshape(1, -1),
        "wv_t": wv.T, "bv": bv.reshape(1, -1),
        "wh_t": wh.T, "bh": bh.reshape(1, -1),
        "wc_t": wc.T, "bc": bc.reshape(1, -1),
    }
    # TODO(synk): the `concat` fuse branch (Linear(1280,768) + Dropout + fc) and
    # the unused self.attn RobertaModel / dead key_layer are not exercised by
    # the 'attention' path and are not implemented.


if __name__ == "__main__":
    key = jax.random.PRNGKey(0)
    k_txt, k_img, k_par = jax.random.split(key, 3)

    B = 2
    text_features = jax.random.normal(k_txt, (B, 768), jnp.float32)
    img_features = jax.random.normal(k_img, (B, 1280, 1, 1), jnp.float32)
    params = make_params(k_par)
    folded = jax.tree_util.tree_map(jax.block_until_ready, fold_params(params))

    fwd = jax.jit(functools.partial(multimodel_attention_forward, folded=folded))
    out, aux = fwd(text_features, img_features)
    out = jax.block_until_ready(out)

    ref = _reference_forward(text_features, img_features, params)
    assert out.shape == (B, NUM_CLASSES)
    assert aux is None
    assert jnp.allclose(out, ref, rtol=1e-3, atol=1e-3), (out, ref)

    print("KERNEL_OK")
</pallas_src>

<mosaic_0001>
module attributes {stable_mosaic.version = 11 : i64} {
  func.func @_fusion_kernel(%arg0: i32, %arg1: memref<8x768xf32, #tpu.memory_space<vmem>>, %arg2: memref<8x1280xf32, #tpu.memory_space<vmem>>, %arg3: memref<1280x32xf32, #tpu.memory_space<vmem>>, %arg4: memref<1x32xf32, #tpu.memory_space<vmem>>, %arg5: memref<1x3xf32, #tpu.memory_space<vmem>>, %arg6: memref<8x3xf32, #tpu.memory_space<vmem>>) attributes {dimension_semantics = [#tpu.dimension_semantics<parallel>], iteration_bounds = array<i64: 1>, scalar_prefetch = 0 : i64, scratch_operands = 0 : i64, tpu.core_type = #tpu.core_type<tc>, window_params = [{transform_indices = @transform_0, window_bounds = array<i64: 8, 768>}, {transform_indices = @transform_1, window_bounds = array<i64: 8, 1280>}, {pipeline_mode = #tpu.pipeline_mode<synchronous>, transform_indices = @transform_2, window_bounds = array<i64: 1280, 32>}, {pipeline_mode = #tpu.pipeline_mode<synchronous>, transform_indices = @transform_3, window_bounds = array<i64: 1, 32>}, {pipeline_mode = #tpu.pipeline_mode<synchronous>, transform_indices = @transform_4, window_bounds = array<i64: 1, 3>}, {transform_indices = @transform_5, window_bounds = array<i64: 8, 3>}]} {
    %c0 = arith.constant 0 : index
    %c0_0 = arith.constant 0 : index
    %0 = vector.load %arg3[%c0, %c0_0] : memref<1280x32xf32, #tpu.memory_space<vmem>>, vector<1280x32xf32>
    %c0_1 = arith.constant 0 : index
    %c0_2 = arith.constant 0 : index
    %1 = vector.load %arg4[%c0_1, %c0_2] : memref<1x32xf32, #tpu.memory_space<vmem>>, vector<1x32xf32>
    %c0_3 = arith.constant 0 : index
    %c0_4 = arith.constant 0 : index
    %2 = vector.load %arg1[%c0_3, %c0_4] : memref<8x768xf32, #tpu.memory_space<vmem>>, vector<8x768xf32>
    %3 = vector.extract_strided_slice %0 {offsets = [0, 0], sizes = [768, 32], strides = [1, 1]} : vector<1280x32xf32> to vector<768x32xf32>
    %cst = arith.constant dense<0.000000e+00> : vector<8x32xf32>
    %4 = tpu.matmul %2, %3, %cst {dimension_numbers = #tpu.dot_dimension_numbers<[1], [0], [0], [1], [0, 0, 1, 1], [], []>} : vector<8x768xf32>, vector<768x32xf32>, vector<8x32xf32> -> vector<8x32xf32>
    %5 = vector.broadcast %1 : vector<1x32xf32> to vector<8x32xf32>
    %6 = arith.addf %4, %5 : vector<8x32xf32>
    %c0_5 = arith.constant 0 : index
    %c0_6 = arith.constant 0 : index
    %7 = vector.load %arg2[%c0_5, %c0_6] : memref<8x1280xf32, #tpu.memory_space<vmem>>, vector<8x1280xf32>
    %cst_7 = arith.constant dense<0.000000e+00> : vector<8x32xf32>
    %8 = tpu.matmul %7, %0, %cst_7 {dimension_numbers = #tpu.dot_dimension_numbers<[1], [0], [0], [1], [0, 0, 1, 1], [], []>} : vector<8x1280xf32>, vector<1280x32xf32>, vector<8x32xf32> -> vector<8x32xf32>
    %9 = vector.broadcast %1 : vector<1x32xf32> to vector<8x32xf32>
    %10 = arith.addf %8, %9 : vector<8x32xf32>
    %11 = vector.extract_strided_slice %6 {offsets = [0, 0], sizes = [8, 24], strides = [1, 1]} : vector<8x32xf32> to vector<8x24xf32>
    %12 = vector.extract_strided_slice %6 {offsets = [0, 24], sizes = [8, 8], strides = [1, 1]} : vector<8x32xf32> to vector<8x8xf32>
    %13 = vector.extract_strided_slice %10 {offsets = [0, 0], sizes = [8, 24], strides = [1, 1]} : vector<8x32xf32> to vector<8x24xf32>
    %14 = vector.extract_strided_slice %10 {offsets = [0, 24], sizes = [8, 8], strides = [1, 1]} : vector<8x32xf32> to vector<8x8xf32>
    %15 = arith.maximumf %12, %14 : vector<8x8xf32>
    %16 = arith.subf %12, %15 : vector<8x8xf32>
    %17 = math.exp %16 : vector<8x8xf32>
    %18 = arith.subf %14, %15 : vector<8x8xf32>
    %19 = math.exp %18 : vector<8x8xf32>
    %20 = arith.addf %17, %19 : vector<8x8xf32>
    %21 = tpu.reciprocal %20 {approx = true} : vector<8x8xf32> -> vector<8x8xf32>
    %22 = arith.mulf %17, %21 : vector<8x8xf32>
    %23 = arith.mulf %19, %21 : vector<8x8xf32>
    %24 = vector.extract_strided_slice %11 {offsets = [0, 0], sizes = [8, 8], strides = [1, 1]} : vector<8x24xf32> to vector<8x8xf32>
    %25 = arith.mulf %22, %24 : vector<8x8xf32>
    %26 = vector.extract_strided_slice %13 {offsets = [0, 0], sizes = [8, 8], strides = [1, 1]} : vector<8x24xf32> to vector<8x8xf32>
    %27 = arith.mulf %23, %26 : vector<8x8xf32>
    %28 = arith.addf %25, %27 : vector<8x8xf32>
    %cst_8 = arith.constant dense<0.000000e+00> : vector<8xf32>
    %29 = vector.multi_reduction <add>, %28, %cst_8 [1] : vector<8x8xf32> to vector<8xf32>
    %30 = vector.shape_cast %29 : vector<8xf32> to vector<8x1xf32>
    %31 = vector.extract_strided_slice %11 {offsets = [0, 8], sizes = [8, 8], strides = [1, 1]} : vector<8x24xf32> to vector<8x8xf32>
    %32 = arith.mulf %22, %31 : vector<8x8xf32>
    %33 = vector.extract_strided_slice %13 {offsets = [0, 8], sizes = [8, 8], strides = [1, 1]} : vector<8x24xf32> to vector<8x8xf32>
    %34 = arith.mulf %23, %33 : vector<8x8xf32>
    %35 = arith.addf %32, %34 : vector<8x8xf32>
    %cst_9 = arith.constant dense<0.000000e+00> : vector<8xf32>
    %36 = vector.multi_reduction <add>, %35, %cst_9 [1] : vector<8x8xf32> to vector<8xf32>
    %37 = vector.shape_cast %36 : vector<8xf32> to vector<8x1xf32>
    %38 = vector.extract_strided_slice %11 {offsets = [0, 16], sizes = [8, 8], strides = [1, 1]} : vector<8x24xf32> to vector<8x8xf32>
    %39 = arith.mulf %22, %38 : vector<8x8xf32>
    %40 = vector.extract_strided_slice %13 {offsets = [0, 16], sizes = [8, 8], strides = [1, 1]} : vector<8x24xf32> to vector<8x8xf32>
    %41 = arith.mulf %23, %40 : vector<8x8xf32>
    %42 = arith.addf %39, %41 : vector<8x8xf32>
    %cst_10 = arith.constant dense<0.000000e+00> : vector<8xf32>
    %43 = vector.multi_reduction <add>, %42, %cst_10 [1] : vector<8x8xf32> to vector<8xf32>
    %44 = vector.shape_cast %43 : vector<8xf32> to vector<8x1xf32>
    %45 = tpu.concatenate %30, %37, %44 in 1 : vector<8x1xf32>, vector<8x1xf32>, vector<8x1xf32> -> vector<8x3xf32>
    %c0_11 = arith.constant 0 : index
    %c0_12 = arith.constant 0 : index
    %46 = vector.load %arg5[%c0_11, %c0_12] : memref<1x3xf32, #tpu.memory_space<vmem>>, vector<1x3xf32>
    %47 = vector.broadcast %46 : vector<1x3xf32> to vector<8x3xf32>
    %48 = arith.addf %45, %47 : vector<8x3xf32>
    %c0_13 = arith.constant 0 : index
    %c0_14 = arith.constant 0 : index
    %49 = vector.load %arg6[%c0_13, %c0_14] : memref<8x3xf32, #tpu.memory_space<vmem>>, vector<8x3xf32>
    tpu.vector_store %arg6[%c0_13, %c0_14], %48 {strides = array<i32>} : memref<8x3xf32, #tpu.memory_space<vmem>>, vector<8x3xf32>,
    return
  }
  func.func @transform_0(%arg0: i32) -> (i32, i32) {
    %c0_i32 = arith.constant 0 : i32
    %c0_i32_0 = arith.constant 0 : i32
    return %arg0, %c0_i32 : i32, i32
  }
  func.func @transform_1(%arg0: i32) -> (i32, i32) {
    %c0_i32 = arith.constant 0 : i32
    %c0_i32_0 = arith.constant 0 : i32
    return %arg0, %c0_i32 : i32, i32
  }
  func.func @transform_2(%arg0: i32) -> (i32, i32) {
    %c0_i32 = arith.constant 0 : i32
    %c0_i32_0 = arith.constant 0 : i32
    %c0_i32_1 = arith.constant 0 : i32
    return %c0_i32, %c0_i32_0 : i32, i32
  }
  func.func @transform_3(%arg0: i32) -> (i32, i32) {
    %c0_i32 = arith.constant 0 : i32
    %c0_i32_0 = arith.constant 0 : i32
    %c0_i32_1 = arith.constant 0 : i32
    return %c0_i32, %c0_i32_0 : i32, i32
  }
  func.func @transform_4(%arg0: i32) -> (i32, i32) {
    %c0_i32 = arith.constant 0 : i32
    %c0_i32_0 = arith.constant 0 : i32
    %c0_i32_1 = arith.constant 0 : i32
    return %c0_i32, %c0_i32_0 : i32, i32
  }
  func.func @transform_5(%arg0: i32) -> (i32, i32) {
    %c0_i32 = arith.constant 0 : i32
    %c0_i32_0 = arith.constant 0 : i32
    return %arg0, %c0_i32 : i32, i32
  }
}

</mosaic_0001>

<llo_original>
// kernel: multimodel_attention_forward.1
$region0: #{multimodel_attention_forward.1}
  #allocation0 [shape = 'u32[]', space=smem, size = 0x4, offset = 0x4, fixed_abs, tag = 'smem constant byte address 0x4 - core index']
  #allocation1 [shape = 'u32[144,128]{1,0:T(1,128)}', space=vmem, size = 0x12000, scoped, tag = 'internal scratch']
  %s0 = inlined_call_operand.vmem [shape: f32[8,768], index: 0, kind: input, shape index: {}]
  %s1 = inlined_call_operand.vmem [shape: f32[8,1280], index: 1, kind: input, shape index: {}]
  %s2 = inlined_call_operand.hbm [shape: f32[1280,32], index: 2, kind: input, shape index: {}]
  %s3 = inlined_call_operand.vmem [shape: f32[1,32], index: 3, kind: input, shape index: {}]
  %s4 = inlined_call_operand.vmem [shape: f32[1,3], index: 4, kind: input, shape index: {}]
  %s5 = inlined_call_operand.vmem [shape: f32[8,3], index: 5, kind: output, shape index: {}]
  %s6 = sld [smem:[#allocation0]]
  $region34: #{multimodel_attention_forward.1} parent=0
    _
  %s8 = ssub.s32 1, %s6
  %s9 = scalar_select 0, %s8, %s6
  $region1: #{multimodel_attention_forward.1} parent=0
    #allocation2 [shape = 'u8[655360]{0}', space=vmem, size = 0xa0000, scoped, tag = 'input window, operand 2, single buffered']
    #allocation3 [shape = 's32[1]{0}', space=sflag, size = 0x4, scoped, tag = 'scoped memory for multimodel_attention_forward.1']
    %10 = vsyncpa [#allocation3], 0
    // Predicated region
    $region2: #{multimodel_attention_forward.1} parent=1 // pred_check
      _
    $region3: #{multimodel_attention_forward.1} parent=1 // pred_check_branch
      %12 = sbr.rel (0) target = $region5
    $region4: #{multimodel_attention_forward.1} parent=1 // pred_region
      _
    $region5: #{multimodel_attention_forward.1} parent=1 // pred_fallthru
      _
    // Predicated region
    $region6: #{multimodel_attention_forward.1} parent=1 // pred_check
      _
    $region7: #{multimodel_attention_forward.1} parent=1 // pred_check_branch
      %14 = sbr.rel (0) target = $region9
    $region8: #{multimodel_attention_forward.1} parent=1 // pred_region
      _
    $region9: #{multimodel_attention_forward.1} parent=1 // pred_fallthru
      _
    // Predicated region
    $region10: #{multimodel_attention_forward.1} parent=1 // pred_check
      _
    $region11: #{multimodel_attention_forward.1} parent=1 // pred_check_branch
      %16 = sbr.rel (0) target = $region13
    $region12: #{multimodel_attention_forward.1} parent=1 // pred_region
      %s18 = ssub.s32 20480, 20480
      %19 = vsyncadd [#allocation3], %s18
      %s20 = sshll.u32 [#allocation2], 4
      %s21 = int_to_ptr.vmem [resolvable:$true] %s20
      %26 = dma.hbm_to_vmem [thread:$0]  %s2, 20480, %s21, [#allocation3], 128, 128, 8
    $region13: #{multimodel_attention_forward.1} parent=1 // pred_fallthru
      _
    // Predicated region
    $region14: #{multimodel_attention_forward.1} parent=1 // pred_check
      _
    $region15: #{multimodel_attention_forward.1} parent=1 // pred_check_branch
      %28 = sbr.rel (0) target = $region17
    $region16: #{multimodel_attention_forward.1} parent=1 // pred_region
      _
    $region17: #{multimodel_attention_forward.1} parent=1 // pred_fallthru
      _
    // Predicated region
    $region18: #{multimodel_attention_forward.1} parent=1 // pred_check
      _
    $region19: #{multimodel_attention_forward.1} parent=1 // pred_check_branch
      %30 = sbr.rel (0) target = $region21
    $region20: #{multimodel_attention_forward.1} parent=1 // pred_region
      _
    $region21: #{multimodel_attention_forward.1} parent=1 // pred_fallthru
      _
    // Predicated region
    $region22: #{multimodel_attention_forward.1} parent=1 // pred_check
      _
    $region23: #{multimodel_attention_forward.1} parent=1 // pred_check_branch
      %32 = sbr.rel (0) target = $region25
    $region24: #{multimodel_attention_forward.1} parent=1 // pred_region
      %33 = dma.done [#allocation3], 20480
    $region25: #{multimodel_attention_forward.1} parent=1 // pred_fallthru
      _
    %v34 = vld [vmem:[#allocation2] sm:$0xff]
    %v35 = vld [vmem:[#allocation2 + $0x8] sm:$0xff]
    %v36 = vld [vmem:[#allocation2 + $0x10] sm:$0xff]
    %v37 = vld [vmem:[#allocation2 + $0x18] sm:$0xff]
    %v38 = vld [vmem:[#allocation2 + $0x20] sm:$0xff]
    %v39 = vld [vmem:[#allocation2 + $0x28] sm:$0xff]
    %v40 = vld [vmem:[#allocation2 + $0x30] sm:$0xff]
    %v41 = vld [vmem:[#allocation2 + $0x38] sm:$0xff]
    %v42 = vld [vmem:[#allocation2 + $0x40] sm:$0xff]
    %v43 = vld [vmem:[#allocation2 + $0x48] sm:$0xff]
    %v44 = vld [vmem:[#allocation2 + $0x50] sm:$0xff]
    %v45 = vld [vmem:[#allocation2 + $0x58] sm:$0xff]
    %v46 = vld [vmem:[#allocation2 + $0x60] sm:$0xff]
    %v47 = vld [vmem:[#allocation2 + $0x68] sm:$0xff]
    %v48 = vld [vmem:[#allocation2 + $0x70] sm:$0xff]
    %v49 = vld [vmem:[#allocation2 + $0x78] sm:$0xff]
    %v50 = vld [vmem:[#allocation2 + $0x80] sm:$0xff]
    %v51 = vld [vmem:[#allocation2 + $0x88] sm:$0xff]
    %v52 = vld [vmem:[#allocation2 + $0x90] sm:$0xff]
    %v53 = vld [vmem:[#allocation2 + $0x98] sm:$0xff]
    %v54 = vld [vmem:[#allocation2 + $0xa0] sm:$0xff]
    %v55 = vld [vmem:[#allocation2 + $0xa8] sm:$0xff]
    %v56 = vld [vmem:[#allocation2 + $0xb0] sm:$0xff]
    %v57 = vld [vmem:[#allocation2 + $0xb8] sm:$0xff]
    %v58 = vld [vmem:[#allocation2 + $0xc0] sm:$0xff]
    %v59 = vld [vmem:[#allocation2 + $0xc8] sm:$0xff]
    %v60 = vld [vmem:[#allocation2 + $0xd0] sm:$0xff]
    %v61 = vld [vmem:[#allocation2 + $0xd8] sm:$0xff]
    %v62 = vld [vmem:[#allocation2 + $0xe0] sm:$0xff]
    %v63 = vld [vmem:[#allocation2 + $0xe8] sm:$0xff]
    %v64 = vld [vmem:[#allocation2 + $0xf0] sm:$0xff]
    %v65 = vld [vmem:[#allocation2 + $0xf8] sm:$0xff]
    %v66 = vld [vmem:[#allocation2 + $0x100] sm:$0xff]
    %v67 = vld [vmem:[#allocation2 + $0x108] sm:$0xff]
    %v68 = vld [vmem:[#allocation2 + $0x110] sm:$0xff]
    %v69 = vld [vmem:[#allocation2 + $0x118] sm:$0xff]
    %v70 = vld [vmem:[#allocation2 + $0x120] sm:$0xff]
    %v71 = vld [vmem:[#allocation2 + $0x128] sm:$0xff]
    %v72 = vld [vmem:[#allocation2 + $0x130] sm:$0xff]
    %v73 = vld [vmem:[#allocation2 + $0x138] sm:$0xff]
    %v74 = vld [vmem:[#allocation2 + $0x140] sm:$0xff]
    %v75 = vld [vmem:[#allocation2 + $0x148] sm:$0xff]
    %v76 = vld [vmem:[#allocation2 + $0x150] sm:$0xff]
    %v77 = vld [vmem:[#allocation2 + $0x158] sm:$0xff]
    %v78 = vld [vmem:[#allocation2 + $0x160] sm:$0xff]
    %v79 = vld [vmem:[#allocation2 + $0x168] sm:$0xff]
    %v80 = vld [vmem:[#allocation2 + $0x170] sm:$0xff]
    %v81 = vld [vmem:[#allocation2 + $0x178] sm:$0xff]
    %v82 = vld [vmem:[#allocation2 + $0x180] sm:$0xff]
    %v83 = vld [vmem:[#allocation2 + $0x188] sm:$0xff]
    %v84 = vld [vmem:[#allocation2 + $0x190] sm:$0xff]
    %v85 = vld [vmem:[#allocation2 + $0x198] sm:$0xff]
    %v86 = vld [vmem:[#allocation2 + $0x1a0] sm:$0xff]
    %v87 = vld [vmem:[#allocation2 + $0x1a8] sm:$0xff]
    %v88 = vld [vmem:[#allocation2 + $0x1b0] sm:$0xff]
    %v89 = vld [vmem:[#allocation2 + $0x1b8] sm:$0xff]
    %v90 = vld [vmem:[#allocation2 + $0x1c0] sm:$0xff]
    %v91 = vld [vmem:[#allocation2 + $0x1c8] sm:$0xff]
    %v92 = vld [vmem:[#allocation2 + $0x1d0] sm:$0xff]
    %v93 = vld [vmem:[#allocation2 + $0x1d8] sm:$0xff]
    %v94 = vld [vmem:[#allocation2 + $0x1e0] sm:$0xff]
    %v95 = vld [vmem:[#allocation2 + $0x1e8] sm:$0xff]
    %v96 = vld [vmem:[#allocation2 + $0x1f0] sm:$0xff]
    %v97 = vld [vmem:[#allocation2 + $0x1f8] sm:$0xff]
    %v98 = vld [vmem:[#allocation2 + $0x200] sm:$0xff]
    %v99 = vld [vmem:[#allocation2 + $0x208] sm:$0xff]
    %v100 = vld [vmem:[#allocation2 + $0x210] sm:$0xff]
    %v101 = vld [vmem:[#allocation2 + $0x218] sm:$0xff]
    %v102 = vld [vmem:[#allocation2 + $0x220] sm:$0xff]
    %v103 = vld [vmem:[#allocation2 + $0x228] sm:$0xff]
    %v104 = vld [vmem:[#allocation2 + $0x230] sm:$0xff]
    %v105 = vld [vmem:[#allocation2 + $0x238] sm:$0xff]
    %v106 = vld [vmem:[#allocation2 + $0x240] sm:$0xff]
    %v107 = vld [vmem:[#allocation2 + $0x248] sm:$0xff]
    %v108 = vld [vmem:[#allocation2 + $0x250] sm:$0xff]
    %v109 = vld [vmem:[#allocation2 + $0x258] sm:$0xff]
    %v110 = vld [vmem:[#allocation2 + $0x260] sm:$0xff]
    %v111 = vld [vmem:[#allocation2 + $0x268] sm:$0xff]
    %v112 = vld [vmem:[#allocation2 + $0x270] sm:$0xff]
    %v113 = vld [vmem:[#allocation2 + $0x278] sm:$0xff]
    %v114 = vld [vmem:[#allocation2 + $0x280] sm:$0xff]
    %v115 = vld [vmem:[#allocation2 + $0x288] sm:$0xff]
    %v116 = vld [vmem:[#allocation2 + $0x290] sm:$0xff]
    %v117 = vld [vmem:[#allocation2 + $0x298] sm:$0xff]
    %v118 = vld [vmem:[#allocation2 + $0x2a0] sm:$0xff]
    %v119 = vld [vmem:[#allocation2 + $0x2a8] sm:$0xff]
    %v120 = vld [vmem:[#allocation2 + $0x2b0] sm:$0xff]
    %v121 = vld [vmem:[#allocation2 + $0x2b8] sm:$0xff]
    %v122 = vld [vmem:[#allocation2 + $0x2c0] sm:$0xff]
    %v123 = vld [vmem:[#allocation2 + $0x2c8] sm:$0xff]
    %v124 = vld [vmem:[#allocation2 + $0x2d0] sm:$0xff]
    %v125 = vld [vmem:[#allocation2 + $0x2d8] sm:$0xff]
    %v126 = vld [vmem:[#allocation2 + $0x2e0] sm:$0xff]
    %v127 = vld [vmem:[#allocation2 + $0x2e8] sm:$0xff]
    %v128 = vld [vmem:[#allocation2 + $0x2f0] sm:$0xff]
    %v129 = vld [vmem:[#allocation2 + $0x2f8] sm:$0xff]
    %v130 = vld [vmem:[#allocation2 + $0x300] sm:$0xff]
    %v131 = vld [vmem:[#allocation2 + $0x308] sm:$0xff]
    %v132 = vld [vmem:[#allocation2 + $0x310] sm:$0xff]
    %v133 = vld [vmem:[#allocation2 + $0x318] sm:$0xff]
    %v134 = vld [vmem:[#allocation2 + $0x320] sm:$0xff]
    %v135 = vld [vmem:[#allocation2 + $0x328] sm:$0xff]
    %v136 = vld [vmem:[#allocation2 + $0x330] sm:$0xff]
    %v137 = vld [vmem:[#allocation2 + $0x338] sm:$0xff]
    %v138 = vld [vmem:[#allocation2 + $0x340] sm:$0xff]
    %v139 = vld [vmem:[#allocation2 + $0x348] sm:$0xff]
    %v140 = vld [vmem:[#allocation2 + $0x350] sm:$0xff]
    %v141 = vld [vmem:[#allocation2 + $0x358] sm:$0xff]
    %v142 = vld [vmem:[#allocation2 + $0x360] sm:$0xff]
    %v143 = vld [vmem:[#allocation2 + $0x368] sm:$0xff]
    %v144 = vld [vmem:[#allocation2 + $0x370] sm:$0xff]
    %v145 = vld [vmem:[#allocation2 + $0x378] sm:$0xff]
    %v146 = vld [vmem:[#allocation2 + $0x380] sm:$0xff]
    %v147 = vld [vmem:[#allocation2 + $0x388] sm:$0xff]
    %v148 = vld [vmem:[#allocation2 + $0x390] sm:$0xff]
    %v149 = vld [vmem:[#allocation2 + $0x398] sm:$0xff]
    %v150 = vld [vmem:[#allocation2 + $0x3a0] sm:$0xff]
    %v151 = vld [vmem:[#allocation2 + $0x3a8] sm:$0xff]
    %v152 = vld [vmem:[#allocation2 + $0x3b0] sm:$0xff]
    %v153 = vld [vmem:[#allocation2 + $0x3b8] sm:$0xff]
    %v154 = vld [vmem:[#allocation2 + $0x3c0] sm:$0xff]
    %v155 = vld [vmem:[#allocation2 + $0x3c8] sm:$0xff]
    %v156 = vld [vmem:[#allocation2 + $0x3d0] sm:$0xff]
    %v157 = vld [vmem:[#allocation2 + $0x3d8] sm:$0xff]
    %v158 = vld [vmem:[#allocation2 + $0x3e0] sm:$0xff]
    %v159 = vld [vmem:[#allocation2 + $0x3e8] sm:$0xff]
    %v160 = vld [vmem:[#allocation2 + $0x3f0] sm:$0xff]
    %v161 = vld [vmem:[#allocation2 + $0x3f8] sm:$0xff]
    %v162 = vld [vmem:[#allocation2 + $0x400] sm:$0xff]
    %v163 = vld [vmem:[#allocation2 + $0x408] sm:$0xff]
    %v164 = vld [vmem:[#allocation2 + $0x410] sm:$0xff]
    %v165 = vld [vmem:[#allocation2 + $0x418] sm:$0xff]
    %v166 = vld [vmem:[#allocation2 + $0x420] sm:$0xff]
    %v167 = vld [vmem:[#allocation2 + $0x428] sm:$0xff]
    %v168 = vld [vmem:[#allocation2 + $0x430] sm:$0xff]
    %v169 = vld [vmem:[#allocation2 + $0x438] sm:$0xff]
    %v170 = vld [vmem:[#allocation2 + $0x440] sm:$0xff]
    %v171 = vld [vmem:[#allocation2 + $0x448] sm:$0xff]
    %v172 = vld [vmem:[#allocation2 + $0x450] sm:$0xff]
    %v173 = vld [vmem:[#allocation2 + $0x458] sm:$0xff]
    %v174 = vld [vmem:[#allocation2 + $0x460] sm:$0xff]
    %v175 = vld [vmem:[#allocation2 + $0x468] sm:$0xff]
    %v176 = vld [vmem:[#allocation2 + $0x470] sm:$0xff]
    %v177 = vld [vmem:[#allocation2 + $0x478] sm:$0xff]
    %v178 = vld [vmem:[#allocation2 + $0x480] sm:$0xff]
    %v179 = vld [vmem:[#allocation2 + $0x488] sm:$0xff]
    %v180 = vld [vmem:[#allocation2 + $0x490] sm:$0xff]
    %v181 = vld [vmem:[#allocation2 + $0x498] sm:$0xff]
    %v182 = vld [vmem:[#allocation2 + $0x4a0] sm:$0xff]
    %v183 = vld [vmem:[#allocation2 + $0x4a8] sm:$0xff]
    %v184 = vld [vmem:[#allocation2 + $0x4b0] sm:$0xff]
    %v185 = vld [vmem:[#allocation2 + $0x4b8] sm:$0xff]
    %v186 = vld [vmem:[#allocation2 + $0x4c0] sm:$0xff]
    %v187 = vld [vmem:[#allocation2 + $0x4c8] sm:$0xff]
    %v188 = vld [vmem:[#allocation2 + $0x4d0] sm:$0xff]
    %v189 = vld [vmem:[#allocation2 + $0x4d8] sm:$0xff]
    %v190 = vld [vmem:[#allocation2 + $0x4e0] sm:$0xff]
    %v191 = vld [vmem:[#allocation2 + $0x4e8] sm:$0xff]
    %v192 = vld [vmem:[#allocation2 + $0x4f0] sm:$0xff]
    %v193 = vld [vmem:[#allocation2 + $0x4f8] sm:$0xff]
    %v194 = vld [vmem:[%s3] sm:$0x1]
    %v195 = vld [vmem:[%s0] sm:$0xff]
    %v196 = vld [vmem:[%s0 + $0x8] sm:$0xff]
    %v197 = vld [vmem:[%s0 + $0x10] sm:$0xff]
    %v198 = vld [vmem:[%s0 + $0x18] sm:$0xff]
    %v199 = vld [vmem:[%s0 + $0x20] sm:$0xff]
    %v200 = vld [vmem:[%s0 + $0x28] sm:$0xff]
    %v202 = vlaneseq
    %v203 = vshrl.u32 %v202, 7
    %v204 = vsub.s32 0, %v203
    %v205 = vrot.slane %v194, %v204
    %207 = vmatprep.subr.mxu0 0.0
    %208 = vmatpush1.msra.mxu0 %v49
    %209 = vmatprep.subr.mxu0 0.0
    %210 = vmatpush1.msra.mxu0 %v48
    %211 = vmatprep.subr.mxu0 0.0
    %212 = vmatpush1.msra.mxu0 %v47
    %213 = vmatprep.subr.mxu0 0.0
    %214 = vmatpush1.msra.mxu0 %v46
    %215 = vmatprep.subr.mxu0 0.0
    %216 = vmatpush1.msra.mxu0 %v45
    %217 = vmatprep.subr.mxu0 0.0
    %218 = vmatpush1.msra.mxu0 %v44
    %219 = vmatprep.subr.mxu0 0.0
    %220 = vmatpush1.msra.mxu0 %v43
    %221 = vmatprep.subr.mxu0 0.0
    %222 = vmatpush1.msra.mxu0 %v42
    %223 = vmatprep.subr.mxu0 0.0
    %224 = vmatpush1.msra.mxu0 %v41
    %225 = vmatprep.subr.mxu0 0.0
    %226 = vmatpush1.msra.mxu0 %v40
    %227 = vmatprep.subr.mxu0 0.0
    %228 = vmatpush1.msra.mxu0 %v39
    %229 = vmatprep.subr.mxu0 0.0
    %230 = vmatpush1.msra.mxu0 %v38
    %231 = vmatprep.subr.mxu0 0.0
    %232 = vmatpush1.msra.mxu0 %v37
    %233 = vmatprep.subr.mxu0 0.0
    %234 = vmatpush1.msra.mxu0 %v36
    %235 = vmatprep.subr.mxu0 0.0
    %236 = vmatpush1.msra.mxu0 %v35
    %237 = vmatprep.subr.mxu0 0.0
    %238 = vmatpush1.msra.mxu0 %v34
    %239 = vmatprep.subr.mxu0 0.0
    %240 = vmatpush2.msra.mxu0 %v65
    %241 = vmatprep.subr.mxu0 0.0
    %242 = vmatpush2.msra.mxu0 %v64
    %243 = vmatprep.subr.mxu0 0.0
    %244 = vmatpush2.msra.mxu0 %v63
    %245 = vmatprep.subr.mxu0 0.0
    %246 = vmatpush2.msra.mxu0 %v62
    %247 = vmatprep.subr.mxu0 0.0
    %248 = vmatpush2.msra.mxu0 %v61
    %249 = vmatprep.subr.mxu0 0.0
    %250 = vmatpush2.msra.mxu0 %v60
    %251 = vmatprep.subr.mxu0 0.0
    %252 = vmatpush2.msra.mxu0 %v59
    %253 = vmatprep.subr.mxu0 0.0
    %254 = vmatpush2.msra.mxu0 %v58
    %255 = vmatprep.subr.mxu0 0.0
    %256 = vmatpush2.msra.mxu0 %v57
    %257 = vmatprep.subr.mxu0 0.0
    %258 = vmatpush2.msra.mxu0 %v56
    %259 = vmatprep.subr.mxu0 0.0
    %260 = vmatpush2.msra.mxu0 %v55
    %261 = vmatprep.subr.mxu0 0.0
    %262 = vmatpush2.msra.mxu0 %v54
    %263 = vmatprep.subr.mxu0 0.0
    %264 = vmatpush2.msra.mxu0 %v53
    %265 = vmatprep.subr.mxu0 0.0
    %266 = vmatpush2.msra.mxu0 %v52
    %267 = vmatprep.subr.mxu0 0.0
    %268 = vmatpush2.msra.mxu0 %v51
    %269 = vmatprep.subr.mxu0 0.0
    %270 = vmatpush2.msra.mxu0 %v50
    %271 = vmatprep.mubr.f32.mxu0 %v196
    %272 = vmatmul.mubr.f32.gmra.mxu0 %v195
    %v273 = vpop.f32.mrf.mxu0
    %v274 = vadd.f32 %v205, %v273
    %v275 = vpop.f32.mrf.mxu0
    %276 = vdwg.mxu0
    %277 = vmatprep.subr.mxu0 0.0
    %278 = vmatpush1.msra.mxu0 %v81
    %279 = vmatprep.subr.mxu0 0.0
    %280 = vmatpush1.msra.mxu0 %v80
    %281 = vmatprep.subr.mxu0 0.0
    %282 = vmatpush1.msra.mxu0 %v79
    %283 = vmatprep.subr.mxu0 0.0
    %284 = vmatpush1.msra.mxu0 %v78
    %285 = vmatprep.subr.mxu0 0.0
    %286 = vmatpush1.msra.mxu0 %v77
    %287 = vmatprep.subr.mxu0 0.0
    %288 = vmatpush1.msra.mxu0 %v76
    %289 = vmatprep.subr.mxu0 0.0
    %290 = vmatpush1.msra.mxu0 %v75
    %291 = vmatprep.subr.mxu0 0.0
    %292 = vmatpush1.msra.mxu0 %v74
    %293 = vmatprep.subr.mxu0 0.0
    %294 = vmatpush1.msra.mxu0 %v73
    %295 = vmatprep.subr.mxu0 0.0
    %296 = vmatpush1.msra.mxu0 %v72
    %297 = vmatprep.subr.mxu0 0.0
    %298 = vmatpush1.msra.mxu0 %v71
    %299 = vmatprep.subr.mxu0 0.0
    %300 = vmatpush1.msra.mxu0 %v70
    %301 = vmatprep.subr.mxu0 0.0
    %302 = vmatpush1.msra.mxu0 %v69
    %303 = vmatprep.subr.mxu0 0.0
    %304 = vmatpush1.msra.mxu0 %v68
    %305 = vmatprep.subr.mxu0 0.0
    %306 = vmatpush1.msra.mxu0 %v67
    %307 = vmatprep.subr.mxu0 0.0
    %308 = vmatpush1.msra.mxu0 %v66
    %309 = vmatprep.subr.mxu0 0.0
    %310 = vmatpush2.msra.mxu0 %v97
    %311 = vmatprep.subr.mxu0 0.0
    %312 = vmatpush2.msra.mxu0 %v96
    %313 = vmatprep.subr.mxu0 0.0
    %314 = vmatpush2.msra.mxu0 %v95
    %315 = vmatprep.subr.mxu0 0.0
    %316 = vmatpush2.msra.mxu0 %v94
    %317 = vmatprep.subr.mxu0 0.0
    %318 = vmatpush2.msra.mxu0 %v93
    %319 = vmatprep.subr.mxu0 0.0
    %320 = vmatpush2.msra.mxu0 %v92
    %321 = vmatprep.subr.mxu0 0.0
    %322 = vmatpush2.msra.mxu0 %v91
    %323 = vmatprep.subr.mxu0 0.0
    %324 = vmatpush2.msra.mxu0 %v90
    %325 = vmatprep.subr.mxu0 0.0
    %326 = vmatpush2.msra.mxu0 %v89
    %327 = vmatprep.subr.mxu0 0.0
    %328 = vmatpush2.msra.mxu0 %v88
    %329 = vmatprep.subr.mxu0 0.0
    %330 = vmatpush2.msra.mxu0 %v87
    %331 = vmatprep.subr.mxu0 0.0
    %332 = vmatpush2.msra.mxu0 %v86
    %333 = vmatprep.subr.mxu0 0.0
    %334 = vmatpush2.msra.mxu0 %v85
    %335 = vmatprep.subr.mxu0 0.0
    %336 = vmatpush2.msra.mxu0 %v84
    %337 = vmatprep.subr.mxu0 0.0
    %338 = vmatpush2.msra.mxu0 %v83
    %339 = vmatprep.subr.mxu0 0.0
    %340 = vmatpush2.msra.mxu0 %v82
    %341 = vmatprep.mubr.f32.mxu0 %v198
    %342 = vmatmul.mubr.f32.gmra.mxu0 %v197
    %v343 = vpop.f32.mrf.mxu0
    %v344 = vadd.f32 %v274, %v343
    %v345 = vpop.f32.mrf.mxu0
    %346 = vdwg.mxu0
    %347 = vmatprep.subr.mxu0 0.0
    %348 = vmatpush1.msra.mxu0 %v113
    %349 = vmatprep.subr.mxu0 0.0
    %350 = vmatpush1.msra.mxu0 %v112
    %351 = vmatprep.subr.mxu0 0.0
    %352 = vmatpush1.msra.mxu0 %v111
    %353 = vmatprep.subr.mxu0 0.0
    %354 = vmatpush1.msra.mxu0 %v110
    %355 = vmatprep.subr.mxu0 0.0
    %356 = vmatpush1.msra.mxu0 %v109
    %357 = vmatprep.subr.mxu0 0.0
    %358 = vmatpush1.msra.mxu0 %v108
    %359 = vmatprep.subr.mxu0 0.0
    %360 = vmatpush1.msra.mxu0 %v107
    %361 = vmatprep.subr.mxu0 0.0
    %362 = vmatpush1.msra.mxu0 %v106
    %363 = vmatprep.subr.mxu0 0.0
    %364 = vmatpush1.msra.mxu0 %v105
    %365 = vmatprep.subr.mxu0 0.0
    %366 = vmatpush1.msra.mxu0 %v104
    %367 = vmatprep.subr.mxu0 0.0
    %368 = vmatpush1.msra.mxu0 %v103
    %369 = vmatprep.subr.mxu0 0.0
    %370 = vmatpush1.msra.mxu0 %v102
    %371 = vmatprep.subr.mxu0 0.0
    %372 = vmatpush1.msra.mxu0 %v101
    %373 = vmatprep.subr.mxu0 0.0
    %374 = vmatpush1.msra.mxu0 %v100
    %375 = vmatprep.subr.mxu0 0.0
    %376 = vmatpush1.msra.mxu0 %v99
    %377 = vmatprep.subr.mxu0 0.0
    %378 = vmatpush1.msra.mxu0 %v98
    %379 = vmatprep.subr.mxu0 0.0
    %380 = vmatpush2.msra.mxu0 %v129
    %381 = vmatprep.subr.mxu0 0.0
    %382 = vmatpush2.msra.mxu0 %v128
    %383 = vmatprep.subr.mxu0 0.0
    %384 = vmatpush2.msra.mxu0 %v127
    %385 = vmatprep.subr.mxu0 0.0
    %386 = vmatpush2.msra.mxu0 %v126
    %387 = vmatprep.subr.mxu0 0.0
    %388 = vmatpush2.msra.mxu0 %v125
    %389 = vmatprep.subr.mxu0 0.0
    %390 = vmatpush2.msra.mxu0 %v124
    %391 = vmatprep.subr.mxu0 0.0
    %392 = vmatpush2.msra.mxu0 %v123
    %393 = vmatprep.subr.mxu0 0.0
    %394 = vmatpush2.msra.mxu0 %v122
    %395 = vmatprep.subr.mxu0 0.0
    %396 = vmatpush2.msra.mxu0 %v121
    %397 = vmatprep.subr.mxu0 0.0
    %398 = vmatpush2.msra.mxu0 %v120
    %399 = vmatprep.subr.mxu0 0.0
    %400 = vmatpush2.msra.mxu0 %v119
    %401 = vmatprep.subr.mxu0 0.0
    %402 = vmatpush2.msra.mxu0 %v118
    %403 = vmatprep.subr.mxu0 0.0
    %404 = vmatpush2.msra.mxu0 %v117
    %405 = vmatprep.subr.mxu0 0.0
    %406 = vmatpush2.msra.mxu0 %v116
    %407 = vmatprep.subr.mxu0 0.0
    %408 = vmatpush2.msra.mxu0 %v115
    %409 = vmatprep.subr.mxu0 0.0
    %410 = vmatpush2.msra.mxu0 %v114
    %411 = vmatprep.mubr.f32.mxu0 %v200
    %412 = vmatmul.mubr.f32.gmra.mxu0 %v199
    %v413 = vpop.f32.mrf.mxu0
    %v414 = vadd.f32 %v344, %v413
    %v415 = vpop.f32.mrf.mxu0
    %416 = vdwg.mxu0
    %v417 = vld [vmem:[%s1] sm:$0xff]
    %v418 = vld [vmem:[%s1 + $0x8] sm:$0xff]
    %v419 = vld [vmem:[%s1 + $0x10] sm:$0xff]
    %v420 = vld [vmem:[%s1 + $0x18] sm:$0xff]
    %v421 = vld [vmem:[%s1 + $0x20] sm:$0xff]
    %v422 = vld [vmem:[%s1 + $0x28] sm:$0xff]
    %v423 = vld [vmem:[%s1 + $0x30] sm:$0xff]
    %v424 = vld [vmem:[%s1 + $0x38] sm:$0xff]
    %v425 = vld [vmem:[%s1 + $0x40] sm:$0xff]
    %v426 = vld [vmem:[%s1 + $0x48] sm:$0xff]
    %427 = vmatprep.subr.mxu0 0.0
    %428 = vmatpush1.msra.mxu0 %v49
    %429 = vmatprep.subr.mxu0 0.0
    %430 = vmatpush1.msra.mxu0 %v48
    %431 = vmatprep.subr.mxu0 0.0
    %432 = vmatpush1.msra.mxu0 %v47
    %433 = vmatprep.subr.mxu0 0.0
    %434 = vmatpush1.msra.mxu0 %v46
    %435 = vmatprep.subr.mxu0 0.0
    %436 = vmatpush1.msra.mxu0 %v45
    %437 = vmatprep.subr.mxu0 0.0
    %438 = vmatpush1.msra.mxu0 %v44
    %439 = vmatprep.subr.mxu0 0.0
    %440 = vmatpush1.msra.mxu0 %v43
    %441 = vmatprep.subr.mxu0 0.0
    %442 = vmatpush1.msra.mxu0 %v42
    %443 = vmatprep.subr.mxu0 0.0
    %444 = vmatpush1.msra.mxu0 %v41
    %445 = vmatprep.subr.mxu0 0.0
    %446 = vmatpush1.msra.mxu0 %v40
    %447 = vmatprep.subr.mxu0 0.0
    %448 = vmatpush1.msra.mxu0 %v39
    %449 = vmatprep.subr.mxu0 0.0
    %450 = vmatpush1.msra.mxu0 %v38
    %451 = vmatprep.subr.mxu0 0.0
    %452 = vmatpush1.msra.mxu0 %v37
    %453 = vmatprep.subr.mxu0 0.0
    %454 = vmatpush1.msra.mxu0 %v36
    %455 = vmatprep.subr.mxu0 0.0
    %456 = vmatpush1.msra.mxu0 %v35
    %457 = vmatprep.subr.mxu0 0.0
    %458 = vmatpush1.msra.mxu0 %v34
    %459 = vmatprep.subr.mxu0 0.0
    %460 = vmatpush2.msra.mxu0 %v65
    %461 = vmatprep.subr.mxu0 0.0
    %462 = vmatpush2.msra.mxu0 %v64
    %463 = vmatprep.subr.mxu0 0.0
    %464 = vmatpush2.msra.mxu0 %v63
    %465 = vmatprep.subr.mxu0 0.0
    %466 = vmatpush2.msra.mxu0 %v62
    %467 = vmatprep.subr.mxu0 0.0
    %468 = vmatpush2.msra.mxu0 %v61
    %469 = vmatprep.subr.mxu0 0.0
    %470 = vmatpush2.msra.mxu0 %v60
    %471 = vmatprep.subr.mxu0 0.0
    %472 = vmatpush2.msra.mxu0 %v59
    %473 = vmatprep.subr.mxu0 0.0
    %474 = vmatpush2.msra.mxu0 %v58
    %475 = vmatprep.subr.mxu0 0.0
    %476 = vmatpush2.msra.mxu0 %v57
    %477 = vmatprep.subr.mxu0 0.0
    %478 = vmatpush2.msra.mxu0 %v56
    %479 = vmatprep.subr.mxu0 0.0
    %480 = vmatpush2.msra.mxu0 %v55
    %481 = vmatprep.subr.mxu0 0.0
    %482 = vmatpush2.msra.mxu0 %v54
    %483 = vmatprep.subr.mxu0 0.0
    %484 = vmatpush2.msra.mxu0 %v53
    %485 = vmatprep.subr.mxu0 0.0
    %486 = vmatpush2.msra.mxu0 %v52
    %487 = vmatprep.subr.mxu0 0.0
    %488 = vmatpush2.msra.mxu0 %v51
    %489 = vmatprep.subr.mxu0 0.0
    %490 = vmatpush2.msra.mxu0 %v50
    %491 = vmatprep.mubr.f32.mxu0 %v418
    %492 = vmatmul.mubr.f32.gmra.mxu0 %v417
    %v493 = vpop.f32.mrf.mxu0
    %v494 = vadd.f32 %v205, %v493
    %v495 = vpop.f32.mrf.mxu0
    %496 = vdwg.mxu0
    %497 = vmatprep.subr.mxu0 0.0
    %498 = vmatpush1.msra.mxu0 %v81
    %499 = vmatprep.subr.mxu0 0.0
    %500 = vmatpush1.msra.mxu0 %v80
    %501 = vmatprep.subr.mxu0 0.0
    %502 = vmatpush1.msra.mxu0 %v79
    %503 = vmatprep.subr.mxu0 0.0
    %504 = vmatpush1.msra.mxu0 %v78
    %505 = vmatprep.subr.mxu0 0.0
    %506 = vmatpush1.msra.mxu0 %v77
    %507 = vmatprep.subr.mxu0 0.0
    %508 = vmatpush1.msra.mxu0 %v76
    %509 = vmatprep.subr.mxu0 0.0
    %510 = vmatpush1.msra.mxu0 %v75
    %511 = vmatprep.subr.mxu0 0.0
    %512 = vmatpush1.msra.mxu0 %v74
    %513 = vmatprep.subr.mxu0 0.0
    %514 = vmatpush1.msra.mxu0 %v73
    %515 = vmatprep.subr.mxu0 0.0
    %516 = vmatpush1.msra.mxu0 %v72
    %517 = vmatprep.subr.mxu0 0.0
    %518 = vmatpush1.msra.mxu0 %v71
    %519 = vmatprep.subr.mxu0 0.0
    %520 = vmatpush1.msra.mxu0 %v70
    %521 = vmatprep.subr.mxu0 0.0
    %522 = vmatpush1.msra.mxu0 %v69
    %523 = vmatprep.subr.mxu0 0.0
    %524 = vmatpush1.msra.mxu0 %v68
    %525 = vmatprep.subr.mxu0 0.0
    %526 = vmatpush1.msra.mxu0 %v67
    %527 = vmatprep.subr.mxu0 0.0
    %528 = vmatpush1.msra.mxu0 %v66
    %529 = vmatprep.subr.mxu0 0.0
    %530 = vmatpush2.msra.mxu0 %v97
    %531 = vmatprep.subr.mxu0 0.0
    %532 = vmatpush2.msra.mxu0 %v96
    %533 = vmatprep.subr.mxu0 0.0
    %534 = vmatpush2.msra.mxu0 %v95
    %535 = vmatprep.subr.mxu0 0.0
    %536 = vmatpush2.msra.mxu0 %v94
    %537 = vmatprep.subr.mxu0 0.0
    %538 = vmatpush2.msra.mxu0 %v93
    %539 = vmatprep.subr.mxu0 0.0
    %540 = vmatpush2.msra.mxu0 %v92
    %541 = vmatprep.subr.mxu0 0.0
    %542 = vmatpush2.msra.mxu0 %v91
    %543 = vmatprep.subr.mxu0 0.0
    %544 = vmatpush2.msra.mxu0 %v90
    %545 = vmatprep.subr.mxu0 0.0
    %546 = vmatpush2.msra.mxu0 %v89
    %547 = vmatprep.subr.mxu0 0.0
    %548 = vmatpush2.msra.mxu0 %v88
    %549 = vmatprep.subr.mxu0 0.0
    %550 = vmatpush2.msra.mxu0 %v87
    %551 = vmatprep.subr.mxu0 0.0
    %552 = vmatpush2.msra.mxu0 %v86
    %553 = vmatprep.subr.mxu0 0.0
    %554 = vmatpush2.msra.mxu0 %v85
    %555 = vmatprep.subr.mxu0 0.0
    %556 = vmatpush2.msra.mxu0 %v84
    %557 = vmatprep.subr.mxu0 0.0
    %558 = vmatpush2.msra.mxu0 %v83
    %559 = vmatprep.subr.mxu0 0.0
    %560 = vmatpush2.msra.mxu0 %v82
    %561 = vmatprep.mubr.f32.mxu0 %v420
    %562 = vmatmul.mubr.f32.gmra.mxu0 %v419
    %v563 = vpop.f32.mrf.mxu0
    %v564 = vadd.f32 %v494, %v563
    %v565 = vpop.f32.mrf.mxu0
    %566 = vdwg.mxu0
    %567 = vmatprep.subr.mxu0 0.0
    %568 = vmatpush1.msra.mxu0 %v113
    %569 = vmatprep.subr.mxu0 0.0
    %570 = vmatpush1.msra.mxu0 %v112
    %571 = vmatprep.subr.mxu0 0.0
    %572 = vmatpush1.msra.mxu0 %v111
    %573 = vmatprep.subr.mxu0 0.0
    %574 = vmatpush1.msra.mxu0 %v110
    %575 = vmatprep.subr.mxu0 0.0
    %576 = vmatpush1.msra.mxu0 %v109
    %577 = vmatprep.subr.mxu0 0.0
    %578 = vmatpush1.msra.mxu0 %v108
    %579 = vmatprep.subr.mxu0 0.0
    %580 = vmatpush1.msra.mxu0 %v107
    %581 = vmatprep.subr.mxu0 0.0
    %582 = vmatpush1.msra.mxu0 %v106
    %583 = vmatprep.subr.mxu0 0.0
    %584 = vmatpush1.msra.mxu0 %v105
    %585 = vmatprep.subr.mxu0 0.0
    %586 = vmatpush1.msra.mxu0 %v104
    %587 = vmatprep.subr.mxu0 0.0
    %588 = vmatpush1.msra.mxu0 %v103
    %589 = vmatprep.subr.mxu0 0.0
    %590 = vmatpush1.msra.mxu0 %v102
    %591 = vmatprep.subr.mxu0 0.0
    %592 = vmatpush1.msra.mxu0 %v101
    %593 = vmatprep.subr.mxu0 0.0
    %594 = vmatpush1.msra.mxu0 %v100
    %595 = vmatprep.subr.mxu0 0.0
    %596 = vmatpush1.msra.mxu0 %v99
    %597 = vmatprep.subr.mxu0 0.0
    %598 = vmatpush1.msra.mxu0 %v98
    %599 = vmatprep.subr.mxu0 0.0
    %600 = vmatpush2.msra.mxu0 %v129
    %601 = vmatprep.subr.mxu0 0.0
    %602 = vmatpush2.msra.mxu0 %v128
    %603 = vmatprep.subr.mxu0 0.0
    %604 = vmatpush2.msra.mxu0 %v127
    %605 = vmatprep.subr.mxu0 0.0
    %606 = vmatpush2.msra.mxu0 %v126
    %607 = vmatprep.subr.mxu0 0.0
    %608 = vmatpush2.msra.mxu0 %v125
    %609 = vmatprep.subr.mxu0 0.0
    %610 = vmatpush2.msra.mxu0 %v124
    %611 = vmatprep.subr.mxu0 0.0
    %612 = vmatpush2.msra.mxu0 %v123
    %613 = vmatprep.subr.mxu0 0.0
    %614 = vmatpush2.msra.mxu0 %v122
    %615 = vmatprep.subr.mxu0 0.0
    %616 = vmatpush2.msra.mxu0 %v121
    %617 = vmatprep.subr.mxu0 0.0
    %618 = vmatpush2.msra.mxu0 %v120
    %619 = vmatprep.subr.mxu0 0.0
    %620 = vmatpush2.msra.mxu0 %v119
    %621 = vmatprep.subr.mxu0 0.0
    %622 = vmatpush2.msra.mxu0 %v118
    %623 = vmatprep.subr.mxu0 0.0
    %624 = vmatpush2.msra.mxu0 %v117
    %625 = vmatprep.subr.mxu0 0.0
    %626 = vmatpush2.msra.mxu0 %v116
    %627 = vmatprep.subr.mxu0 0.0
    %628 = vmatpush2.msra.mxu0 %v115
    %629 = vmatprep.subr.mxu0 0.0
    %630 = vmatpush2.msra.mxu0 %v114
    %631 = vmatprep.mubr.f32.mxu0 %v422
    %632 = vmatmul.mubr.f32.gmra.mxu0 %v421
    %v633 = vpop.f32.mrf.mxu0
    %v634 = vadd.f32 %v564, %v633
    %v635 = vpop.f32.mrf.mxu0
    %636 = vdwg.mxu0
    %637 = vmatprep.subr.mxu0 0.0
    %638 = vmatpush1.msra.mxu0 %v145
    %639 = vmatprep.subr.mxu0 0.0
    %640 = vmatpush1.msra.mxu0 %v144
    %641 = vmatprep.subr.mxu0 0.0
    %642 = vmatpush1.msra.mxu0 %v143
    %643 = vmatprep.subr.mxu0 0.0
    %644 = vmatpush1.msra.mxu0 %v142
    %645 = vmatprep.subr.mxu0 0.0
    %646 = vmatpush1.msra.mxu0 %v141
    %647 = vmatprep.subr.mxu0 0.0
    %648 = vmatpush1.msra.mxu0 %v140
    %649 = vmatprep.subr.mxu0 0.0
    %650 = vmatpush1.msra.mxu0 %v139
    %651 = vmatprep.subr.mxu0 0.0
    %652 = vmatpush1.msra.mxu0 %v138
    %653 = vmatprep.subr.mxu0 0.0
    %654 = vmatpush1.msra.mxu0 %v137
    %655 = vmatprep.subr.mxu0 0.0
    %656 = vmatpush1.msra.mxu0 %v136
    %657 = vmatprep.subr.mxu0 0.0
    %658 = vmatpush1.msra.mxu0 %v135
    %659 = vmatprep.subr.mxu0 0.0
    %660 = vmatpush1.msra.mxu0 %v134
    %661 = vmatprep.subr.mxu0 0.0
    %662 = vmatpush1.msra.mxu0 %v133
    %663 = vmatprep.subr.mxu0 0.0
    %664 = vmatpush1.msra.mxu0 %v132
    %665 = vmatprep.subr.mxu0 0.0
    %666 = vmatpush1.msra.mxu0 %v131
    %667 = vmatprep.subr.mxu0 0.0
    %668 = vmatpush1.msra.mxu0 %v130
    %669 = vmatprep.subr.mxu0 0.0
    %670 = vmatpush2.msra.mxu0 %v161
    %671 = vmatprep.subr.mxu0 0.0
    %672 = vmatpush2.msra.mxu0 %v160
    %673 = vmatprep.subr.mxu0 0.0
    %674 = vmatpush2.msra.mxu0 %v159
    %675 = vmatprep.subr.mxu0 0.0
    %676 = vmatpush2.msra.mxu0 %v158
    %677 = vmatprep.subr.mxu0 0.0
    %678 = vmatpush2.msra.mxu0 %v157
    %679 = vmatprep.subr.mxu0 0.0
    %680 = vmatpush2.msra.mxu0 %v156
    %681 = vmatprep.subr.mxu0 0.0
    %682 = vmatpush2.msra.mxu0 %v155
    %683 = vmatprep.subr.mxu0 0.0
    %684 = vmatpush2.msra.mxu0 %v154
    %685 = vmatprep.subr.mxu0 0.0
    %686 = vmatpush2.msra.mxu0 %v153
    %687 = vmatprep.subr.mxu0 0.0
    %688 = vmatpush2.msra.mxu0 %v152
    %689 = vmatprep.subr.mxu0 0.0
    %690 = vmatpush2.msra.mxu0 %v151
    %691 = vmatprep.subr.mxu0 0.0
    %692 = vmatpush2.msra.mxu0 %v150
    %693 = vmatprep.subr.mxu0 0.0
    %694 = vmatpush2.msra.mxu0 %v149
    %695 = vmatprep.subr.mxu0 0.0
    %696 = vmatpush2.msra.mxu0 %v148
    %697 = vmatprep.subr.mxu0 0.0
    %698 = vmatpush2.msra.mxu0 %v147
    %699 = vmatprep.subr.mxu0 0.0
    %700 = vmatpush2.msra.mxu0 %v146
    %701 = vmatprep.mubr.f32.mxu0 %v424
    %702 = vmatmul.mubr.f32.gmra.mxu0 %v423
    %v703 = vpop.f32.mrf.mxu0
    %v704 = vadd.f32 %v634, %v703
    %v705 = vpop.f32.mrf.mxu0
    %706 = vdwg.mxu0
    %707 = vmatprep.subr.mxu0 0.0
    %708 = vmatpush1.msra.mxu0 %v177
    %709 = vmatprep.subr.mxu0 0.0
    %710 = vmatpush1.msra.mxu0 %v176
    %711 = vmatprep.subr.mxu0 0.0
    %712 = vmatpush1.msra.mxu0 %v175
    %713 = vmatprep.subr.mxu0 0.0
    %714 = vmatpush1.msra.mxu0 %v174
    %715 = vmatprep.subr.mxu0 0.0
    %716 = vmatpush1.msra.mxu0 %v173
    %717 = vmatprep.subr.mxu0 0.0
    %718 = vmatpush1.msra.mxu0 %v172
    %719 = vmatprep.subr.mxu0 0.0
    %720 = vmatpush1.msra.mxu0 %v171
    %721 = vmatprep.subr.mxu0 0.0
    %722 = vmatpush1.msra.mxu0 %v170
    %723 = vmatprep.subr.mxu0 0.0
    %724 = vmatpush1.msra.mxu0 %v169
    %725 = vmatprep.subr.mxu0 0.0
    %726 = vmatpush1.msra.mxu0 %v168
    %727 = vmatprep.subr.mxu0 0.0
    %728 = vmatpush1.msra.mxu0 %v167
    %729 = vmatprep.subr.mxu0 0.0
    %730 = vmatpush1.msra.mxu0 %v166
    %731 = vmatprep.subr.mxu0 0.0
    %732 = vmatpush1.msra.mxu0 %v165
    %733 = vmatprep.subr.mxu0 0.0
    %734 = vmatpush1.msra.mxu0 %v164
    %735 = vmatprep.subr.mxu0 0.0
    %736 = vmatpush1.msra.mxu0 %v163
    %737 = vmatprep.subr.mxu0 0.0
    %738 = vmatpush1.msra.mxu0 %v162
    %739 = vmatprep.subr.mxu0 0.0
    %740 = vmatpush2.msra.mxu0 %v193
    %741 = vmatprep.subr.mxu0 0.0
    %742 = vmatpush2.msra.mxu0 %v192
    %743 = vmatprep.subr.mxu0 0.0
    %744 = vmatpush2.msra.mxu0 %v191
    %745 = vmatprep.subr.mxu0 0.0
    %746 = vmatpush2.msra.mxu0 %v190
    %747 = vmatprep.subr.mxu0 0.0
    %748 = vmatpush2.msra.mxu0 %v189
    %749 = vmatprep.subr.mxu0 0.0
    %750 = vmatpush2.msra.mxu0 %v188
    %751 = vmatprep.subr.mxu0 0.0
    %752 = vmatpush2.msra.mxu0 %v187
    %753 = vmatprep.subr.mxu0 0.0
    %754 = vmatpush2.msra.mxu0 %v186
    %755 = vmatprep.subr.mxu0 0.0
    %756 = vmatpush2.msra.mxu0 %v185
    %757 = vmatprep.subr.mxu0 0.0
    %758 = vmatpush2.msra.mxu0 %v184
    %759 = vmatprep.subr.mxu0 0.0
    %760 = vmatpush2.msra.mxu0 %v183
    %761 = vmatprep.subr.mxu0 0.0
    %762 = vmatpush2.msra.mxu0 %v182
    %763 = vmatprep.subr.mxu0 0.0
    %764 = vmatpush2.msra.mxu0 %v181
    %765 = vmatprep.subr.mxu0 0.0
    %766 = vmatpush2.msra.mxu0 %v180
    %767 = vmatprep.subr.mxu0 0.0
    %768 = vmatpush2.msra.mxu0 %v179
    %769 = vmatprep.subr.mxu0 0.0
    %770 = vmatpush2.msra.mxu0 %v178
    %771 = vmatprep.mubr.f32.mxu0 %v426
    %772 = vmatmul.mubr.f32.gmra.mxu0 %v425
    %v773 = vpop.f32.mrf.mxu0
    %v774 = vadd.f32 %v704, %v773
    %v775 = vpop.f32.mrf.mxu0
    %776 = vdwg.mxu0
    %v777 = vmax.f32 %v414, %v774
    %v778 = vsub.f32 %v414, %v777
    %v779 = vmul.f32 %v778, 1.442695
    %v780 = vpow.pop %v779
    %v781 = vsub.f32 %v774, %v777
    %v782 = vmul.f32 %v781, 1.442695
    %v783 = vpow.pop %v782
    %v784 = vadd.f32 %v780, %v783
    %v785 = vrcp.pop %v784
    %v786 = vmul.f32 %v780, %v785
    %v787 = vmul.f32 %v783, %v785
    %789 = vrot.lane.b32.xlu0 %v414, 24
    %v790 = vpop.permute.xlu0 %789
    %v792 = vmul.f32 %v786, %v790
    %794 = vrot.lane.b32.xlu0 %v774, 24
    %v795 = vpop.permute.xlu0 %794
    %v797 = vmul.f32 %v787, %v795
    %v798 = vadd.f32 %v792, %v797
    %800 = vrot.lane.b32.xlu0 %v798, 104
    %v801 = vpop.permute.xlu0 %800
    %vm803 = vcmask 64512
    %v804 = vsel %vm803, %v801, 0.0
    %805 = vadd.xlane.f32.xlu0 %v804
    %v806 = vpop.xlane.xlu0 %805
    %807 = vrot.lane.b32.xlu0 %v414, 16
    %v808 = vpop.permute.xlu0 %807
    %v810 = vmul.f32 %v786, %v808
    %811 = vrot.lane.b32.xlu0 %v774, 16
    %v812 = vpop.permute.xlu0 %811
    %v814 = vmul.f32 %v787, %v812
    %v815 = vadd.f32 %v810, %v814
    %817 = vrot.lane.b32.xlu0 %v815, 104
    %v818 = vpop.permute.xlu0 %817
    %v820 = vsel %vm803, %v818, 0.0
    %821 = vadd.xlane.f32.xlu0 %v820
    %v822 = vpop.xlane.xlu0 %821
    %823 = vrot.lane.b32.xlu0 %v414, 8
    %v824 = vpop.permute.xlu0 %823
    %v826 = vmul.f32 %v786, %v824
    %827 = vrot.lane.b32.xlu0 %v774, 8
    %v828 = vpop.permute.xlu0 %827
    %v830 = vmul.f32 %v787, %v828
    %v831 = vadd.f32 %v826, %v830
    %833 = vrot.lane.b32.xlu0 %v831, 104
    %v834 = vpop.permute.xlu0 %833
    %v836 = vsel %vm803, %v834, 0.0
    %837 = vadd.xlane.f32.xlu0 %v836
    %v838 = vpop.xlane.xlu0 %837
    %vm839 = vcmask 7168
    %v840 = vsel %vm839, %v806, %v822
    %vm841 = vcmask 15360
    %v842 = vsel %vm841, %v840, %v838
    %v843 = vld [vmem:[%s4] sm:$0x1]
    %v845 = vlaneseq
    %v846 = vshrl.u32 %v845, 7
    %v847 = vsub.s32 0, %v846
    %v848 = vrot.slane %v843, %v847
    %v850 = vadd.f32 %v842, %v848
    %vm851 = vcmask 23552
    %852 = vst.msk [vmem:[%s5] sm:$0xff] %vm851, %v850
    // Predicated region
    $region26: #{multimodel_attention_forward.1} parent=1 // pred_check
      _
    $region27: #{multimodel_attention_forward.1} parent=1 // pred_check_branch
      %854 = sbr.rel (0) target = $region29
    $region28: #{multimodel_attention_forward.1} parent=1 // pred_region
      _
    $region29: #{multimodel_attention_forward.1} parent=1 // pred_fallthru
      _
    // Predicated region
    $region30: #{multimodel_attention_forward.1} parent=1 // pred_check
      _
    $region31: #{multimodel_attention_forward.1} parent=1 // pred_check_branch
      %856 = sbr.rel (0) target = $region33
    $region32: #{multimodel_attention_forward.1} parent=1 // pred_region
      _
    $region33: #{multimodel_attention_forward.1} parent=1 // pred_fallthru
      _
    %857 = vsyncpa [#allocation3], 1

</llo_original>
